<compile_context>
chip_gen: v6e
topology: v6e:2x2x1
jax: 0.10.0
libtpu: 0.0.40
codegen_flags: <defaults>
</compile_context>

<pallas_src>
import functools

import jax
import jax.numpy as jnp
import numpy as np
from jax.experimental import pallas as pl
from jax.experimental.pallas import tpu as pltpu

_MIB = 2 ** 20


@functools.lru_cache(maxsize=None)
def _dft_cos_sin_np(n: int):
    """(cos, sin) DFT matrices of shape (n, n) in float64 (exact mod-n phase)."""
    k = np.arange(n, dtype=np.int64)
    idx = np.mod(np.outer(k, k), n).astype(np.float64)
    ang = (2.0 * np.pi / float(n)) * idx
    return np.cos(ang), np.sin(ang)


def _vmem_capacity_bytes():
    """Per-core VMEM capacity; conservative 64 MiB (v7x) if the query fails."""
    try:
        info = pltpu.get_tpu_info()
        cap = getattr(info, "vmem_capacity_bytes", None)
        if cap:
            return int(cap)
    except Exception:
        pass
    return 64 * _MIB


def _num_tensorcores():
    """Best-effort TensorCore count per device (megacore sharding hint)."""
    try:
        info = pltpu.get_tpu_info()
        for name in ("num_cores", "core_count", "num_tensorcores",
                     "tensorcore_count"):
            v = getattr(info, name, None)
            if isinstance(v, int) and v > 0:
                return v
    except Exception:
        pass
    return 1


def _sublane_mult(itemsize: int) -> int:
    """Minimum sublane tile for a given element size (8 f32 / 16 bf16 / 32 i8)."""
    return max(8, 32 // int(itemsize))


def _pick_block(B, R, C, stream_item, out_item, const_item, vmem_limit, cores):
    """How many sequences (bt) to fuse per grid step, VMEM-footprint aware."""
    sub = max(_sublane_mult(stream_item), _sublane_mult(out_item))
    nd1 = R * C                                  # elements per sequence

    def per_step(bt):
        nd = bt * nd1
        return nd * (2 * stream_item             # double-buffered input block
                     + 2 * out_item              # double-buffered output block
                     + 8                         # f32 (bt*R, 2C) stage-1 scratch
                     + stream_item)              # in-flight loaded/cast copy

    fixed = (2 * (2 * C * C + 2 * R * R) * const_item   # 2x-buffered DFT tables
             + nd1 * (8 + 2 * const_item + 4 + out_item)  # stage-2 per-iter temps
             + 2 * _MIB)                                   # compiler scratch slack
    budget = vmem_limit - fixed

    valid = [bt for bt in range(1, B + 1)
             if B % bt == 0 and ((bt * R) % sub == 0 or bt == B)]
    fitting = [bt for bt in valid if per_step(bt) <= budget]
    if not fitting:
        return min(valid)
    if cores > 1:
        # Prefer a step count that splits evenly across TensorCores (v7x).
        balanced = [bt for bt in fitting if (B // bt) % cores == 0]
        if balanced:
            return max(balanced)
    # Single-core (v5e/v6e): never shrink below the VMEM cap to add steps.
    return max(fitting)


def _fourier_kernel(x_ref, wc_ref, cr_ref, sr_ref, o_ref, t_ref, *, bt, r, c):
    """One grid step: bt fused sequences presented as a (bt*r, c) slab.

    Stage 1 (lane-axis mix):  t = x @ [C_c | S_c]          -> (bt*r, 2c) f32
    Stage 2 (row-axis mix):   out_b = C_r @ t_cos_b - S_r @ t_sin_b
    """
    cdt = wc_ref.dtype                        # MXU operand (compute) dtype
    x = x_ref[...]
    if x.dtype != cdt:
        x = x.astype(cdt)
    # Stage 1: single wide MXU issue, constant RHS, f32 accumulation into scratch.
    t_ref[...] = jnp.dot(x, wc_ref[...], preferred_element_type=jnp.float32)
    cr = cr_ref[...]
    sr = sr_ref[...]

    def stage2(lo):
        tb = t_ref[pl.ds(lo, r), :]           # (r, 2c) f32, one sequence
        tc = tb[:, :c].astype(cdt)            #  Re(x_b @ W_c)
        ts = tb[:, c:].astype(cdt)            # -Im(x_b @ W_c)
        ob = (jnp.dot(cr, tc, preferred_element_type=jnp.float32)
              - jnp.dot(sr, ts, preferred_element_type=jnp.float32))
        o_ref[pl.ds(lo, r), :] = ob.astype(o_ref.dtype)

    if bt <= 2:
        # Tiny trip count: static unroll (scheduler visibility, no live blowup).
        for b in range(bt):
            stage2(b * r)
    else:
        # Larger blocks: fori_loop bounds live ranges to one sequence at a time.
        def body(b, carry):
            lo = b * r
            if r % 8 == 0:
                lo = pl.multiple_of(lo, 8)
            stage2(lo)
            return carry
        jax.lax.fori_loop(0, bt, body, 0)


@functools.partial(jax.jit, static_argnames=("compute_dtype",))
def fourier(x, *, compute_dtype=jnp.bfloat16):
    """Pallas TPU equivalent of Fourier.forward for real x of shape (B, N, D).

    Note: bf16 MXU operands (tables + stage-1 recast) limit accuracy to ~1e-2
    relative; pass compute_dtype=jnp.float32 if tighter accuracy is needed.
    """
    B, N, D = x.shape
    out_dtype = x.dtype

    # Orientation: the per-sequence stage runs (R,R)@(R,C) matmuls. Make R the
    # larger axis (so those fill the MXU) only when it clearly helps: N below
    # the MXU tile, D strictly larger, and the resulting lane axis (N) still
    # store-friendly. Otherwise keep the natural layout (no extra HBM passes).
    transpose_rc = (N < 256) and (D > N) and (N >= 128)
    if transpose_rc:
        R, C = D, N
        x2 = jnp.transpose(x, (0, 2, 1)).reshape(B * R, C)
    else:
        R, C = N, D
        x2 = x.reshape(B * R, C)
    x2 = x2.astype(compute_dtype)             # halve streamed bytes (MXU is bf16 anyway)

    # Host-built, cached DFT tables; cast to the MXU operand dtype.
    cc_np, sc_np = _dft_cos_sin_np(C)
    cr_np, sr_np = _dft_cos_sin_np(R)
    wc = jnp.asarray(np.concatenate([cc_np, sc_np], axis=1), dtype=compute_dtype)  # (C, 2C)
    cr = jnp.asarray(cr_np, dtype=compute_dtype)                                    # (R, R)
    sr = jnp.asarray(sr_np, dtype=compute_dtype)                                    # (R, R)

    c_item = np.dtype(compute_dtype).itemsize
    o_item = np.dtype(out_dtype).itemsize

    # Chip-aware scoped-VMEM limit: never the full per-core capacity.
    cap = _vmem_capacity_bytes()
    vmem_limit = max(16 * _MIB, int(min(0.80 * cap, cap - 12 * _MIB)))

    cores = _num_tensorcores()
    bt = _pick_block(B, R, C, c_item, o_item, c_item, vmem_limit, cores)
    grid = (B // bt,)

    kernel = functools.partial(_fourier_kernel, bt=bt, r=R, c=C)

    out2 = pl.pallas_call(
        kernel,
        out_shape=jax.ShapeDtypeStruct((B * R, C), out_dtype),
        grid_spec=pltpu.PrefetchScalarGridSpec(
            num_scalar_prefetch=0,
            grid=grid,
            in_specs=[
                pl.BlockSpec((bt * R, C), lambda i: (i, 0)),   # x slab (streamed)
                pl.BlockSpec((C, 2 * C), lambda i: (0, 0)),    # [C_C | S_C] resident
                pl.BlockSpec((R, R), lambda i: (0, 0)),        # C_R resident
                pl.BlockSpec((R, R), lambda i: (0, 0)),        # S_R resident
            ],
            out_specs=pl.BlockSpec((bt * R, C), lambda i: (i, 0)),
            scratch_shapes=[pltpu.VMEM((bt * R, 2 * C), jnp.float32)],
        ),
        compiler_params=pltpu.CompilerParams(
            dimension_semantics=("parallel",),
            vmem_limit_bytes=int(vmem_limit)),
    )(x2, wc, cr, sr)

    if transpose_rc:
        return out2.reshape(B, D, N).transpose(0, 2, 1)
    return out2.reshape(B, N, D)


def _check(out, x, thresh=3e-2):
    ref = jnp.fft.fft(jnp.fft.fft(x, axis=-1), axis=-2).real
    assert out.shape == ref.shape and out.dtype == x.dtype
    denom = jnp.maximum(jnp.max(jnp.abs(ref)), 1.0)
    err = float(jnp.max(jnp.abs(out - ref)) / denom)
    assert err < thresh, f"error {err} exceeds {thresh}"


if __name__ == "__main__":
    key = jax.random.PRNGKey(0)
    k1, k2, k3 = jax.random.split(key, 3)

    # Test 1: toy shapes implied by the transformer context (batch=2, seq=8, hidden=32).
    x = jax.random.normal(k1, (2, 8, 32), dtype=jnp.float32)
    out = fourier(x)
    jax.block_until_ready(out)
    _check(out, x)

    # Test 2: exercises the transposed (wide weight-stationary N-mixing) path.
    x2 = jax.random.normal(k2, (2, 128, 256), dtype=jnp.float32)
    out2 = fourier(x2)
    jax.block_until_ready(out2)
    _check(out2, x2)

    # Test 3: exercises the multi-sequence block + fori_loop stage-2 path.
    x3 = jax.random.normal(k3, (8, 64, 128), dtype=jnp.float32)
    out3 = fourier(x3)
    jax.block_until_ready(out3)
    _check(out3, x3)

    print("KERNEL_OK")
</pallas_src>

<mosaic_0001>
module attributes {stable_mosaic.version = 11 : i64} {
  func.func @_fourier_kernel(%arg0: i32, %arg1: memref<16x32xbf16, #tpu.memory_space<vmem>>, %arg2: memref<32x64xbf16, #tpu.memory_space<vmem>>, %arg3: memref<8x8xbf16, #tpu.memory_space<vmem>>, %arg4: memref<8x8xbf16, #tpu.memory_space<vmem>>, %arg5: memref<16x32xf32, #tpu.memory_space<vmem>>, %arg6: memref<16x64xf32, #tpu.memory_space<vmem>>) attributes {dimension_semantics = [#tpu.dimension_semantics<parallel>], iteration_bounds = array<i64: 1>, scalar_prefetch = 0 : i64, scratch_operands = 1 : i64, tpu.core_type = #tpu.core_type<tc>, window_params = [{transform_indices = @transform_0, window_bounds = array<i64: 16, 32>}, {pipeline_mode = #tpu.pipeline_mode<synchronous>, transform_indices = @transform_1, window_bounds = array<i64: 32, 64>}, {pipeline_mode = #tpu.pipeline_mode<synchronous>, transform_indices = @transform_2, window_bounds = array<i64: 8, 8>}, {pipeline_mode = #tpu.pipeline_mode<synchronous>, transform_indices = @transform_3, window_bounds = array<i64: 8, 8>}, {transform_indices = @transform_4, window_bounds = array<i64: 16, 32>}]} {
    %c0 = arith.constant 0 : index
    %c0_0 = arith.constant 0 : index
    %0 = vector.load %arg1[%c0, %c0_0] : memref<16x32xbf16, #tpu.memory_space<vmem>>, vector<16x32xbf16>
    %c0_1 = arith.constant 0 : index
    %c0_2 = arith.constant 0 : index
    %1 = vector.load %arg2[%c0_1, %c0_2] : memref<32x64xbf16, #tpu.memory_space<vmem>>, vector<32x64xbf16>
    %cst = arith.constant dense<0.000000e+00> : vector<16x64xf32>
    %2 = tpu.matmul %0, %1, %cst {dimension_numbers = #tpu.dot_dimension_numbers<[1], [0], [0], [1], [0, 0, 1, 1], [], []>} : vector<16x32xbf16>, vector<32x64xbf16>, vector<16x64xf32> -> vector<16x64xf32>
    %c0_3 = arith.constant 0 : index
    %c0_4 = arith.constant 0 : index
    %3 = vector.load %arg6[%c0_3, %c0_4] : memref<16x64xf32, #tpu.memory_space<vmem>>, vector<16x64xf32>
    tpu.vector_store %arg6[%c0_3, %c0_4], %2 {strides = array<i32>} : memref<16x64xf32, #tpu.memory_space<vmem>>, vector<16x64xf32>,
    %c0_5 = arith.constant 0 : index
    %c0_6 = arith.constant 0 : index
    %4 = vector.load %arg3[%c0_5, %c0_6] : memref<8x8xbf16, #tpu.memory_space<vmem>>, vector<8x8xbf16>
    %c0_7 = arith.constant 0 : index
    %c0_8 = arith.constant 0 : index
    %5 = vector.load %arg4[%c0_7, %c0_8] : memref<8x8xbf16, #tpu.memory_space<vmem>>, vector<8x8xbf16>
    %c0_9 = arith.constant 0 : index
    %c0_10 = arith.constant 0 : index
    %6 = vector.load %arg6[%c0_9, %c0_10] : memref<16x64xf32, #tpu.memory_space<vmem>>, vector<8x64xf32>
    %7 = vector.extract_strided_slice %6 {offsets = [0, 0], sizes = [8, 32], strides = [1, 1]} : vector<8x64xf32> to vector<8x32xf32>
    %8 = arith.truncf %7 : vector<8x32xf32> to vector<8x32xbf16>
    %9 = vector.extract_strided_slice %6 {offsets = [0, 32], sizes = [8, 32], strides = [1, 1]} : vector<8x64xf32> to vector<8x32xf32>
    %10 = arith.truncf %9 : vector<8x32xf32> to vector<8x32xbf16>
    %cst_11 = arith.constant dense<0.000000e+00> : vector<8x32xf32>
    %11 = tpu.matmul %4, %8, %cst_11 {dimension_numbers = #tpu.dot_dimension_numbers<[1], [0], [0], [1], [0, 0, 1, 1], [], []>} : vector<8x8xbf16>, vector<8x32xbf16>, vector<8x32xf32> -> vector<8x32xf32>
    %cst_12 = arith.constant dense<0.000000e+00> : vector<8x32xf32>
    %12 = tpu.matmul %5, %10, %cst_12 {dimension_numbers = #tpu.dot_dimension_numbers<[1], [0], [0], [1], [0, 0, 1, 1], [], []>} : vector<8x8xbf16>, vector<8x32xbf16>, vector<8x32xf32> -> vector<8x32xf32>
    %13 = arith.subf %11, %12 : vector<8x32xf32>
    %c0_13 = arith.constant 0 : index
    %c0_14 = arith.constant 0 : index
    %14 = vector.load %arg5[%c0_13, %c0_14] : memref<16x32xf32, #tpu.memory_space<vmem>>, vector<8x32xf32>
    tpu.vector_store %arg5[%c0_13, %c0_14], %13 {strides = array<i32>} : memref<16x32xf32, #tpu.memory_space<vmem>>, vector<8x32xf32>,
    %c8 = arith.constant 8 : index
    %c0_15 = arith.constant 0 : index
    %15 = vector.load %arg6[%c8, %c0_15] : memref<16x64xf32, #tpu.memory_space<vmem>>, vector<8x64xf32>
    %16 = vector.extract_strided_slice %15 {offsets = [0, 0], sizes = [8, 32], strides = [1, 1]} : vector<8x64xf32> to vector<8x32xf32>
    %17 = arith.truncf %16 : vector<8x32xf32> to vector<8x32xbf16>
    %18 = vector.extract_strided_slice %15 {offsets = [0, 32], sizes = [8, 32], strides = [1, 1]} : vector<8x64xf32> to vector<8x32xf32>
    %19 = arith.truncf %18 : vector<8x32xf32> to vector<8x32xbf16>
    %cst_16 = arith.constant dense<0.000000e+00> : vector<8x32xf32>
    %20 = tpu.matmul %4, %17, %cst_16 {dimension_numbers = #tpu.dot_dimension_numbers<[1], [0], [0], [1], [0, 0, 1, 1], [], []>} : vector<8x8xbf16>, vector<8x32xbf16>, vector<8x32xf32> -> vector<8x32xf32>
    %cst_17 = arith.constant dense<0.000000e+00> : vector<8x32xf32>
    %21 = tpu.matmul %5, %19, %cst_17 {dimension_numbers = #tpu.dot_dimension_numbers<[1], [0], [0], [1], [0, 0, 1, 1], [], []>} : vector<8x8xbf16>, vector<8x32xbf16>, vector<8x32xf32> -> vector<8x32xf32>
    %22 = arith.subf %20, %21 : vector<8x32xf32>
    %c8_18 = arith.constant 8 : index
    %c0_19 = arith.constant 0 : index
    %23 = vector.load %arg5[%c8_18, %c0_19] : memref<16x32xf32, #tpu.memory_space<vmem>>, vector<8x32xf32>
    tpu.vector_store %arg5[%c8_18, %c0_19], %22 {strides = array<i32>} : memref<16x32xf32, #tpu.memory_space<vmem>>, vector<8x32xf32>,
    return
  }
  func.func @transform_0(%arg0: i32) -> (i32, i32) {
    %c0_i32 = arith.constant 0 : i32
    %c0_i32_0 = arith.constant 0 : i32
    return %arg0, %c0_i32 : i32, i32
  }
  func.func @transform_1(%arg0: i32) -> (i32, i32) {
    %c0_i32 = arith.constant 0 : i32
    %c0_i32_0 = arith.constant 0 : i32
    %c0_i32_1 = arith.constant 0 : i32
    return %c0_i32, %c0_i32_0 : i32, i32
  }
  func.func @transform_2(%arg0: i32) -> (i32, i32) {
    %c0_i32 = arith.constant 0 : i32
    %c0_i32_0 = arith.constant 0 : i32
    %c0_i32_1 = arith.constant 0 : i32
    return %c0_i32, %c0_i32_0 : i32, i32
  }
  func.func @transform_3(%arg0: i32) -> (i32, i32) {
    %c0_i32 = arith.constant 0 : i32
    %c0_i32_0 = arith.constant 0 : i32
    %c0_i32_1 = arith.constant 0 : i32
    return %c0_i32, %c0_i32_0 : i32, i32
  }
  func.func @transform_4(%arg0: i32) -> (i32, i32) {
    %c0_i32 = arith.constant 0 : i32
    %c0_i32_0 = arith.constant 0 : i32
    return %arg0, %c0_i32 : i32, i32
  }
}

</mosaic_0001>

<llo_original>
// kernel: fourier.1
$region0: #{fourier.1}
  #allocation0 [shape = 'u32[]', space=smem, size = 0x4, offset = 0x4, fixed_abs, tag = 'smem constant byte address 0x4 - core index']
  #allocation1 [shape = 'u32[144,128]{1,0:T(1,128)}', space=vmem, size = 0x12000, scoped, tag = 'internal scratch']
  #allocation2 [shape = 'f32[16,64]{1,0:T(8,128)}', space=vmem, size = 0x2000, scoped, tag = 'scratch operand']
  %s0 = inlined_call_operand.vmem [shape: bf16[16,32], index: 0, kind: input, shape index: {}]
  %s1 = inlined_call_operand.vmem [shape: bf16[32,64], index: 1, kind: input, shape index: {}]
  %s2 = inlined_call_operand.vmem [shape: bf16[8,8], index: 2, kind: input, shape index: {}]
  %s3 = inlined_call_operand.vmem [shape: bf16[8,8], index: 3, kind: input, shape index: {}]
  %s4 = inlined_call_operand.hbm [shape: f32[16,32], index: 4, kind: output, shape index: {}]
  %s5 = sld [smem:[#allocation0]]
  $region26: #{fourier.1} parent=0
    _
  %s7 = ssub.s32 1, %s5
  %s8 = scalar_select 0, %s7, %s5
  $region1: #{fourier.1} parent=0
    #allocation3 [shape = 'u8[8192]{0}', space=vmem, size = 0x2000, scoped, tag = 'output window, operand 0, single buffered']
    #allocation4 [shape = 's32[1]{0}', space=sflag, size = 0x4, scoped, tag = 'scoped memory for fourier.1']
    %9 = vsyncpa [#allocation4], 0
    // Predicated region
    $region2: #{fourier.1} parent=1 // pred_check
      _
    $region3: #{fourier.1} parent=1 // pred_check_branch
      %11 = sbr.rel (0) target = $region5
    $region4: #{fourier.1} parent=1 // pred_region
      _
    $region5: #{fourier.1} parent=1 // pred_fallthru
      _
    // Predicated region
    $region6: #{fourier.1} parent=1 // pred_check
      _
    $region7: #{fourier.1} parent=1 // pred_check_branch
      %13 = sbr.rel (0) target = $region9
    $region8: #{fourier.1} parent=1 // pred_region
      _
    $region9: #{fourier.1} parent=1 // pred_fallthru
      _
    // Predicated region
    $region10: #{fourier.1} parent=1 // pred_check
      _
    $region11: #{fourier.1} parent=1 // pred_check_branch
      %15 = sbr.rel (0) target = $region13
    $region12: #{fourier.1} parent=1 // pred_region
      _
    $region13: #{fourier.1} parent=1 // pred_fallthru
      _
    // Predicated region
    $region14: #{fourier.1} parent=1 // pred_check
      _
    $region15: #{fourier.1} parent=1 // pred_check_branch
      %17 = sbr.rel (0) target = $region17
    $region16: #{fourier.1} parent=1 // pred_region
      _
    $region17: #{fourier.1} parent=1 // pred_fallthru
      _
    %v19 = vld [vmem:[%s0] sm:$0xf]
    %v20 = vld [vmem:[%s0 + $0x4] sm:$0xf]
    %v21 = vld [vmem:[%s1] sm:$0xf]
    %v22 = vld [vmem:[%s1 + $0x4] sm:$0xf]
    %v23 = vld [vmem:[%s1 + $0x8] sm:$0xf]
    %v24 = vld [vmem:[%s1 + $0xc] sm:$0xf]
    %v27 = vunpack.c.l.b16 %v19
    %v28 = vunpack.c.l.b16 %v20
    %v29 = vpack.c.b16 %v28, %v27
    %v34 = vunpack.c.l.b16 %v21
    %v35 = vunpack.c.l.b16 %v22
    %v36 = vunpack.c.l.b16 %v23
    %v37 = vunpack.c.l.b16 %v24
    %v38 = vpack.c.b16 %v35, %v34
    %v39 = vpack.c.b16 %v37, %v36
    %vm42 = vcmask 261120
    %v44 = vsel %vm42, %v29, 0
    %46 = vmatprep.subr.bf16.mxu0 0
    %47 = vmatpush1.bf16.msra.mxu0 0
    %48 = vmatprep.subr.bf16.mxu0 0
    %49 = vmatpush1.bf16.msra.mxu0 0
    %50 = vmatprep.subr.bf16.mxu0 0
    %51 = vmatpush1.bf16.msra.mxu0 0
    %52 = vmatprep.subr.bf16.mxu0 0
    %53 = vmatpush1.bf16.msra.mxu0 0
    %54 = vmatprep.subr.bf16.mxu0 0
    %55 = vmatpush1.bf16.msra.mxu0 0
    %56 = vmatprep.subr.bf16.mxu0 0
    %57 = vmatpush1.bf16.msra.mxu0 0
    %58 = vmatprep.subr.bf16.mxu0 0
    %59 = vmatpush1.bf16.msra.mxu0 %v39
    %60 = vmatprep.subr.bf16.mxu0 0
    %61 = vmatpush1.bf16.msra.mxu0 %v38
    %62 = vmatprep.subr.bf16.mxu0 0
    %63 = vmatpush2.bf16.msra.mxu0 0
    %64 = vmatprep.subr.bf16.mxu0 0
    %65 = vmatpush2.bf16.msra.mxu0 0
    %66 = vmatprep.subr.bf16.mxu0 0
    %67 = vmatpush2.bf16.msra.mxu0 0
    %68 = vmatprep.subr.bf16.mxu0 0
    %69 = vmatpush2.bf16.msra.mxu0 0
    %70 = vmatprep.subr.bf16.mxu0 0
    %71 = vmatpush2.bf16.msra.mxu0 0
    %72 = vmatprep.subr.bf16.mxu0 0
    %73 = vmatpush2.bf16.msra.mxu0 0
    %74 = vmatprep.subr.bf16.mxu0 0
    %75 = vmatpush2.bf16.msra.mxu0 0
    %76 = vmatprep.subr.bf16.mxu0 0
    %77 = vmatpush2.bf16.msra.mxu0 0
    %78 = vmatprep.mubr.bf16.mxu0 0
    %79 = vmatmul.mubr.bf16.gmra.mxu0 %v44
    %v80 = vpop.f32.mrf.mxu0
    %v81 = vadd.f32 0.0, %v80
    %v82 = vpop.f32.mrf.mxu0
    %v83 = vpop.f32.mrf.mxu0
    %v84 = vadd.f32 0.0, %v83
    %v85 = vpop.f32.mrf.mxu0
    %86 = vdwg.mxu0
    %vm87 = vcmask 523264
    %88 = vst.msk [vmem:[#allocation2] sm:$0xff] %vm87, %v81
    %89 = vst.msk [vmem:[#allocation2 + $0x8] sm:$0xff] %vm87, %v84
    %v90 = vld [vmem:[%s2] sm:$0xf]
    %v91 = vld [vmem:[%s3] sm:$0xf]
    %v92 = vld [vmem:[#allocation2] sm:$0xff]
    %v93 = vpack.c.bf16 %v92, %v92
    %vm94 = vcmask 64512
    %v96 = vsel %vm94, %v90, 0
    %vm98 = vcmask 1043456
    %v100 = vsel %vm98, %v93, 0
    %102 = vmatprep.subr.bf16.mxu0 0
    %103 = vmatpush1.bf16.msra.mxu0 0
    %104 = vmatprep.subr.bf16.mxu0 0
    %105 = vmatpush1.bf16.msra.mxu0 0
    %106 = vmatprep.subr.bf16.mxu0 0
    %107 = vmatpush1.bf16.msra.mxu0 0
    %108 = vmatprep.subr.bf16.mxu0 0
    %109 = vmatpush1.bf16.msra.mxu0 0
    %110 = vmatprep.subr.bf16.mxu0 0
    %111 = vmatpush1.bf16.msra.mxu0 0
    %112 = vmatprep.subr.bf16.mxu0 0
    %113 = vmatpush1.bf16.msra.mxu0 0
    %114 = vmatprep.subr.bf16.mxu0 0
    %115 = vmatpush1.bf16.msra.mxu0 0
    %116 = vmatprep.subr.bf16.mxu0 0
    %117 = vmatpush1.bf16.msra.mxu0 %v100
    %118 = vmatprep.subr.bf16.mxu0 0
    %119 = vmatpush2.bf16.msra.mxu0 0
    %120 = vmatprep.subr.bf16.mxu0 0
    %121 = vmatpush2.bf16.msra.mxu0 0
    %122 = vmatprep.subr.bf16.mxu0 0
    %123 = vmatpush2.bf16.msra.mxu0 0
    %124 = vmatprep.subr.bf16.mxu0 0
    %125 = vmatpush2.bf16.msra.mxu0 0
    %126 = vmatprep.subr.bf16.mxu0 0
    %127 = vmatpush2.bf16.msra.mxu0 0
    %128 = vmatprep.subr.bf16.mxu0 0
    %129 = vmatpush2.bf16.msra.mxu0 0
    %130 = vmatprep.subr.bf16.mxu0 0
    %131 = vmatpush2.bf16.msra.mxu0 0
    %132 = vmatprep.subr.bf16.mxu0 0
    %133 = vmatpush2.bf16.msra.mxu0 0
    %134 = vmatprep.mubr.bf16.mxu0 0
    %135 = vmatmul.mubr.bf16.gmra.mxu0 %v96
    %v136 = vpop.f32.mrf.mxu0
    %v137 = vadd.f32 0.0, %v136
    %v138 = vpop.f32.mrf.mxu0
    %v139 = vpop.f32.mrf.mxu0
    %v140 = vpop.f32.mrf.mxu0
    %141 = vdwg.mxu0
    %143 = vrot.lane.b32.xlu0 %v93, 96
    %v144 = vpop.permute.xlu0 %143
    %v146 = vsel %vm94, %v91, 0
    %v149 = vsel %vm98, %v144, 0
    %151 = vmatprep.subr.bf16.mxu0 0
    %152 = vmatpush1.bf16.msra.mxu0 0
    %153 = vmatprep.subr.bf16.mxu0 0
    %154 = vmatpush1.bf16.msra.mxu0 0
    %155 = vmatprep.subr.bf16.mxu0 0
    %156 = vmatpush1.bf16.msra.mxu0 0
    %157 = vmatprep.subr.bf16.mxu0 0
    %158 = vmatpush1.bf16.msra.mxu0 0
    %159 = vmatprep.subr.bf16.mxu0 0
    %160 = vmatpush1.bf16.msra.mxu0 0
    %161 = vmatprep.subr.bf16.mxu0 0
    %162 = vmatpush1.bf16.msra.mxu0 0
    %163 = vmatprep.subr.bf16.mxu0 0
    %164 = vmatpush1.bf16.msra.mxu0 0
    %165 = vmatprep.subr.bf16.mxu0 0
    %166 = vmatpush1.bf16.msra.mxu0 %v149
    %167 = vmatprep.subr.bf16.mxu0 0
    %168 = vmatpush2.bf16.msra.mxu0 0
    %169 = vmatprep.subr.bf16.mxu0 0
    %170 = vmatpush2.bf16.msra.mxu0 0
    %171 = vmatprep.subr.bf16.mxu0 0
    %172 = vmatpush2.bf16.msra.mxu0 0
    %173 = vmatprep.subr.bf16.mxu0 0
    %174 = vmatpush2.bf16.msra.mxu0 0
    %175 = vmatprep.subr.bf16.mxu0 0
    %176 = vmatpush2.bf16.msra.mxu0 0
    %177 = vmatprep.subr.bf16.mxu0 0
    %178 = vmatpush2.bf16.msra.mxu0 0
    %179 = vmatprep.subr.bf16.mxu0 0
    %180 = vmatpush2.bf16.msra.mxu0 0
    %181 = vmatprep.subr.bf16.mxu0 0
    %182 = vmatpush2.bf16.msra.mxu0 0
    %183 = vmatprep.mubr.bf16.mxu0 0
    %184 = vmatmul.mubr.bf16.gmra.mxu0 %v146
    %v185 = vpop.f32.mrf.mxu0
    %v186 = vadd.f32 0.0, %v185
    %v187 = vpop.f32.mrf.mxu0
    %v188 = vpop.f32.mrf.mxu0
    %v189 = vpop.f32.mrf.mxu0
    %190 = vdwg.mxu0
    %v191 = vsub.f32 %v137, %v186
    %192 = vst.msk [vmem:[#allocation3] sm:$0xff] %vm42, %v191
    %v193 = vld [vmem:[#allocation2 + $0x8] sm:$0xff]
    %v194 = vpack.c.bf16 %v193, %v193
    %v196 = vsel %vm98, %v194, 0
    %198 = vmatprep.subr.bf16.mxu0 0
    %199 = vmatpush1.bf16.msra.mxu0 0
    %200 = vmatprep.subr.bf16.mxu0 0
    %201 = vmatpush1.bf16.msra.mxu0 0
    %202 = vmatprep.subr.bf16.mxu0 0
    %203 = vmatpush1.bf16.msra.mxu0 0
    %204 = vmatprep.subr.bf16.mxu0 0
    %205 = vmatpush1.bf16.msra.mxu0 0
    %206 = vmatprep.subr.bf16.mxu0 0
    %207 = vmatpush1.bf16.msra.mxu0 0
    %208 = vmatprep.subr.bf16.mxu0 0
    %209 = vmatpush1.bf16.msra.mxu0 0
    %210 = vmatprep.subr.bf16.mxu0 0
    %211 = vmatpush1.bf16.msra.mxu0 0
    %212 = vmatprep.subr.bf16.mxu0 0
    %213 = vmatpush1.bf16.msra.mxu0 %v196
    %214 = vmatprep.subr.bf16.mxu0 0
    %215 = vmatpush2.bf16.msra.mxu0 0
    %216 = vmatprep.subr.bf16.mxu0 0
    %217 = vmatpush2.bf16.msra.mxu0 0
    %218 = vmatprep.subr.bf16.mxu0 0
    %219 = vmatpush2.bf16.msra.mxu0 0
    %220 = vmatprep.subr.bf16.mxu0 0
    %221 = vmatpush2.bf16.msra.mxu0 0
    %222 = vmatprep.subr.bf16.mxu0 0
    %223 = vmatpush2.bf16.msra.mxu0 0
    %224 = vmatprep.subr.bf16.mxu0 0
    %225 = vmatpush2.bf16.msra.mxu0 0
    %226 = vmatprep.subr.bf16.mxu0 0
    %227 = vmatpush2.bf16.msra.mxu0 0
    %228 = vmatprep.subr.bf16.mxu0 0
    %229 = vmatpush2.bf16.msra.mxu0 0
    %230 = vmatprep.mubr.bf16.mxu0 0
    %231 = vmatmul.mubr.bf16.gmra.mxu0 %v96
    %v232 = vpop.f32.mrf.mxu0
    %v233 = vadd.f32 0.0, %v232
    %v234 = vpop.f32.mrf.mxu0
    %v235 = vpop.f32.mrf.mxu0
    %v236 = vpop.f32.mrf.mxu0
    %237 = vdwg.mxu0
    %239 = vrot.lane.b32.xlu0 %v194, 96
    %v240 = vpop.permute.xlu0 %239
    %v242 = vsel %vm98, %v240, 0
    %244 = vmatprep.subr.bf16.mxu0 0
    %245 = vmatpush1.bf16.msra.mxu0 0
    %246 = vmatprep.subr.bf16.mxu0 0
    %247 = vmatpush1.bf16.msra.mxu0 0
    %248 = vmatprep.subr.bf16.mxu0 0
    %249 = vmatpush1.bf16.msra.mxu0 0
    %250 = vmatprep.subr.bf16.mxu0 0
    %251 = vmatpush1.bf16.msra.mxu0 0
    %252 = vmatprep.subr.bf16.mxu0 0
    %253 = vmatpush1.bf16.msra.mxu0 0
    %254 = vmatprep.subr.bf16.mxu0 0
    %255 = vmatpush1.bf16.msra.mxu0 0
    %256 = vmatprep.subr.bf16.mxu0 0
    %257 = vmatpush1.bf16.msra.mxu0 0
    %258 = vmatprep.subr.bf16.mxu0 0
    %259 = vmatpush1.bf16.msra.mxu0 %v242
    %260 = vmatprep.subr.bf16.mxu0 0
    %261 = vmatpush2.bf16.msra.mxu0 0
    %262 = vmatprep.subr.bf16.mxu0 0
    %263 = vmatpush2.bf16.msra.mxu0 0
    %264 = vmatprep.subr.bf16.mxu0 0
    %265 = vmatpush2.bf16.msra.mxu0 0
    %266 = vmatprep.subr.bf16.mxu0 0
    %267 = vmatpush2.bf16.msra.mxu0 0
    %268 = vmatprep.subr.bf16.mxu0 0
    %269 = vmatpush2.bf16.msra.mxu0 0
    %270 = vmatprep.subr.bf16.mxu0 0
    %271 = vmatpush2.bf16.msra.mxu0 0
    %272 = vmatprep.subr.bf16.mxu0 0
    %273 = vmatpush2.bf16.msra.mxu0 0
    %274 = vmatprep.subr.bf16.mxu0 0
    %275 = vmatpush2.bf16.msra.mxu0 0
    %276 = vmatprep.mubr.bf16.mxu0 0
    %277 = vmatmul.mubr.bf16.gmra.mxu0 %v146
    %v278 = vpop.f32.mrf.mxu0
    %v279 = vadd.f32 0.0, %v278
    %v280 = vpop.f32.mrf.mxu0
    %v281 = vpop.f32.mrf.mxu0
    %v282 = vpop.f32.mrf.mxu0
    %283 = vdwg.mxu0
    %v284 = vsub.f32 %v233, %v279
    %285 = vst.msk [vmem:[#allocation3 + $0x8] sm:$0xff] %vm42, %v284
    // Predicated region
    $region18: #{fourier.1} parent=1 // pred_check
      _
    $region19: #{fourier.1} parent=1 // pred_check_branch
      %287 = sbr.rel (0) target = $region21
    $region20: #{fourier.1} parent=1 // pred_region
      %s289 = ssub.s32 256, 256
      %290 = vsyncadd [#allocation4], %s289
      %s291 = sshll.u32 [#allocation3], 4
      %s292 = int_to_ptr.vmem [resolvable:$true] %s291
      %297 = dma.vmem_to_hbm [thread:$0]  %s292, 256, %s4, [#allocation4], 128, 128, 8
    $region21: #{fourier.1} parent=1 // pred_fallthru
      _
    // Predicated region
    $region22: #{fourier.1} parent=1 // pred_check
      _
    $region23: #{fourier.1} parent=1 // pred_check_branch
      %299 = sbr.rel (0) target = $region25
    $region24: #{fourier.1} parent=1 // pred_region
      %300 = dma.done [#allocation4], 256
    $region25: #{fourier.1} parent=1 // pred_fallthru
      _
    %301 = vsyncpa [#allocation4], 1

</llo_original>
